<compile_context>
chip_gen: v7x
topology: tpu7x:2x2x1
jax: 0.10.0
libtpu: 0.0.40
codegen_flags: <defaults>
</compile_context>

<pallas_src>
import functools

import jax
import jax.numpy as jnp
import numpy as np
from jax.experimental import pallas as pl
from jax.experimental.pallas import tpu as pltpu


def _tan_map_kernel(pm_ref, gm_ref, out_ref, *scratch,
                    rows, cols, n_rows_total, hw_total, inv_hw,
                    num_row_blocks, num_col_blocks,
                    mask_rows, mask_cols, use_mxu, low_precision_diff):
    """Grid step (i, j): reduce a (rows, cols) tile of the (N, H*W) map slab.

    pm_ref, gm_ref : VMEM refs, (rows, cols), native input dtype
    out_ref        : VMEM ref,  (1, 8, 128) f32 partial-sum tile (per row block)
    scratch        : () or (acc_abs, acc_sq) VMEM f32 refs, (rows, stat_w),
                     only allocated when the lane axis is tiled (num_col_blocks>1)
    """
    i = pl.program_id(0)

    x = pm_ref[...]
    y = gm_ref[...]
    if low_precision_diff:
        d0 = x - y                                    # native (bf16) VALU
    else:
        d0 = x.astype(jnp.float32) - y.astype(jnp.float32)

    if mask_cols:
        # Rare fallback path: lane block does not evenly divide H*W.
        j = pl.program_id(1)
        col_ids = j * cols + jax.lax.broadcasted_iota(jnp.int32, d0.shape, 1)
        d0 = jnp.where(col_ids < hw_total, d0, jnp.zeros_like(d0))

    ad = jnp.abs(d0).astype(jnp.float32)
    df = d0.astype(jnp.float32)
    sq = df * df

    if use_mxu:
        # Offload the lane reduction to the (idle) MXU; result is lane-dense
        # (rows, 128) with identical values in every lane.
        ones = jnp.ones((cols, 128), jnp.float32)
        row_abs = jnp.dot(ad, ones, preferred_element_type=jnp.float32)
        row_sq = jnp.dot(sq, ones, preferred_element_type=jnp.float32)
    else:
        row_abs = jnp.sum(ad, axis=-1, keepdims=True)   # (rows, 1)
        row_sq = jnp.sum(sq, axis=-1, keepdims=True)

    def _write(sum_abs, sum_sq, apply_row_mask):
        l1 = sum_abs * inv_hw                         # per-map mean |d|
        l2 = sum_sq * inv_hw                          # per-map mean d^2
        term = jnp.where(l1 < 1.0, 0.5 * l2, l1 - 0.5)[:, :1]   # (rows, 1)
        if apply_row_mask:
            row_ids = i * rows + jax.lax.broadcasted_iota(jnp.int32, term.shape, 0)
            term = jnp.where(row_ids < n_rows_total, term, 0.0)
        out_ref[...] = jnp.full(out_ref.shape, jnp.sum(term), dtype=out_ref.dtype)

    def _finalize(sum_abs, sum_sq):
        if mask_rows:
            last_i = num_row_blocks - 1
            @pl.when(i == last_i)
            def _():
                _write(sum_abs, sum_sq, True)

            @pl.when(i != last_i)
            def _():
                _write(sum_abs, sum_sq, False)
        else:
            _write(sum_abs, sum_sq, False)

    if num_col_blocks > 1:
        acc_abs, acc_sq = scratch
        j = pl.program_id(1)

        @pl.when(j == 0)
        def _():
            acc_abs[...] = row_abs
            acc_sq[...] = row_sq

        @pl.when(j != 0)
        def _():
            acc_abs[...] = acc_abs[...] + row_abs
            acc_sq[...] = acc_sq[...] + row_sq

        @pl.when(j == num_col_blocks - 1)
        def _():
            _finalize(acc_abs[...], acc_sq[...])
    else:
        _finalize(row_abs, row_sq)


def tan_loss_pallas(pred_maps, pred_counts, gt_maps, gt_counts, lamda, beta=None, *,
                    rows_per_block=None, cols_per_block=None,
                    target_block_bytes=None, bf16_elementwise=False):
    """TAN_Loss forward. `beta` is unused in forward() (kept for parity)."""
    B, T, H, W = pred_maps.shape
    N = B * T
    HW = H * W

    # Lane-dense 2-D view of the maps (free reshape of a contiguous array).
    pm = pred_maps.reshape(N, HW)
    gm = gt_maps.reshape(N, HW)

    itemsize = pm.dtype.itemsize
    sub = {4: 8, 2: 16, 1: 32}.get(itemsize, 8)       # sublane pack per dtype

    try:
        vmem_cap = int(pltpu.get_tpu_info().vmem_capacity_bytes)
    except Exception:
        vmem_cap = 64 * 1024 * 1024                   # conservative (v7x)
    if target_block_bytes is None:
        # v7x (64 MiB VMEM): ~8 MiB/input/buffer; v5e/v6e (128 MiB): ~12 MiB.
        target_block_bytes = (8 << 20) if vmem_cap <= (64 << 20) else (12 << 20)

    # ---- column (lane) block: only tile H*W when one aligned row group of the
    # full width would not fit the budget (fixes the huge-map degenerate case).
    if cols_per_block is not None:
        cols = HW if int(cols_per_block) >= HW else max(128, (int(cols_per_block) // 128) * 128)
    else:
        budget_cols = max(128, target_block_bytes // (sub * itemsize))
        if HW <= budget_cols:
            cols = HW
        else:
            cols = 0
            c = (min(budget_cols, HW) // 128) * 128
            while c >= 128:                            # largest 128-aligned divisor
                if HW % c == 0:
                    cols = c
                    break
                c -= 128
            if cols == 0:                              # pathological HW: mask in-kernel
                cols = max(128, (budget_cols // 128) * 128)
    num_col_blocks = -(-HW // cols)
    mask_cols = (HW % cols) != 0

    # ---- row (sublane) block ----
    if rows_per_block is not None:
        rows = max(sub, (int(rows_per_block) // sub) * sub)
    else:
        rows = max(sub, (target_block_bytes // max(1, cols * itemsize)) // sub * sub)
    if rows >= N:
        rows = N                                       # single full-extent row block

    use_mxu = (cols % 128 == 0) and (cols <= 2048)
    stat_w = 128 if use_mxu else 1

    def _need(r):                                      # VMEM footprint estimate
        n = 2 * 2 * r * cols * itemsize                # 2 inputs x double buffer
        n += 2 * r * stat_w * 4                        # scratch accumulators
        n += 2 * 8 * 128 * 4                           # output double buffer
        if use_mxu:
            n += cols * 128 * 4                        # ones matrix
        return n

    vmem_budget = int(0.75 * vmem_cap)
    while _need(rows) > vmem_budget and rows > sub:    # shrink rows until it fits
        rows = max(sub, ((rows // 2) // sub) * sub)

    num_row_blocks = -(-N // rows)
    mask_rows = (N % rows) != 0
    low_precision_diff = bool(bf16_elementwise) and pm.dtype == jnp.bfloat16

    kernel = functools.partial(
        _tan_map_kernel,
        rows=rows, cols=cols, n_rows_total=N, hw_total=HW,
        inv_hw=1.0 / float(HW),
        num_row_blocks=num_row_blocks, num_col_blocks=num_col_blocks,
        mask_rows=mask_rows, mask_cols=mask_cols,
        use_mxu=use_mxu, low_precision_diff=low_precision_diff,
    )

    scratch_shapes = []
    if num_col_blocks > 1:
        scratch_shapes = [pltpu.VMEM((rows, stat_w), jnp.float32),
                          pltpu.VMEM((rows, stat_w), jnp.float32)]

    vmem_limit = max(32 << 20, min(int(_need(rows) * 1.4) + (4 << 20),
                                   int(0.9 * vmem_cap)))

    # NOTE(v5e): if profiling shows exposed DMA, add pipeline_mode=pl.Buffered(3)
    # to the two map BlockSpecs (costs +2*block_bytes of VMEM).
    # TODO(synk): optional single persistent-accumulator output for single-TC
    # chips (v5e/v6e) to skip the per-block output DMAs; kept per-block tiles so
    # the row axis stays "parallel" on v7x.
    partials = pl.pallas_call(
        kernel,
        out_shape=jax.ShapeDtypeStruct((num_row_blocks, 8, 128), jnp.float32),
        grid=(num_row_blocks, num_col_blocks),
        in_specs=[
            pl.BlockSpec((rows, cols), lambda i, j: (i, j)),
            pl.BlockSpec((rows, cols), lambda i, j: (i, j)),
        ],
        out_specs=pl.BlockSpec((1, 8, 128), lambda i, j: (i, 0, 0)),
        scratch_shapes=scratch_shapes,
        compiler_params=pltpu.CompilerParams(
            dimension_semantics=("parallel", "arbitrary"),
            vmem_limit_bytes=int(vmem_limit),
        ),
    )(pm, gm)

    map_sum = jnp.sum(partials[:, 0, 0])               # tiny cross-block reduce

    # ---- count terms: O(B*T) scalars, plain JAX in the wrapper ----
    dc = pred_counts.astype(jnp.float32) - gt_counts.astype(jnp.float32)
    adc = jnp.abs(dc)
    count_smooth = jnp.sum(jnp.where(adc < 1.0, 0.5 * dc * dc, adc - 0.5))
    count_mse = jnp.sum(dc * dc) / float(B)

    total = map_sum + count_mse + lamda * count_smooth
    # PyTorch: per-t loss accumulated, then loss /= T, then .mean()  =>  / T^2
    return total / float(T * T)


def tan_loss_ref(pred_maps, pred_counts, gt_maps, gt_counts, lamda):
    """Pure-JAX reference mirroring the PyTorch semantics."""
    B, T, H, W = pred_maps.shape
    d = pred_maps.astype(jnp.float32) - gt_maps.astype(jnp.float32)
    l1 = jnp.mean(jnp.abs(d), axis=(2, 3))               # [B, T]
    l2 = jnp.mean(d * d, axis=(2, 3))                    # [B, T]
    map_term = jnp.where(l1 < 1.0, 0.5 * l2, l1 - 0.5)

    dc = pred_counts.astype(jnp.float32) - gt_counts.astype(jnp.float32)  # [B, T]
    csm = jnp.where(jnp.abs(dc) < 1.0, 0.5 * dc * dc, jnp.abs(dc) - 0.5)

    loss_t = (jnp.sum(map_term, axis=0)
              + jnp.mean(dc * dc, axis=0)
              + lamda * jnp.sum(csm, axis=0))            # [T]
    return jnp.mean(loss_t / T)


def _make_inputs(key, B, T, H, W):
    k1, k2, k3, k4 = jax.random.split(key, 4)
    # Mix of small and large deviations so both branches of the smooth-L1
    # selection get exercised (maps and counts).
    pred_maps = jax.random.normal(k1, (B, T, H, W), dtype=jnp.float32)
    gt_maps = pred_maps + 0.3 * jax.random.normal(k2, (B, T, H, W), dtype=jnp.float32)
    gt_maps = gt_maps.at[:, ::2].add(2.0)                # force l1 >= 1 on even t
    pred_counts = 5.0 * jax.random.normal(k3, (B, T), dtype=jnp.float32)
    gt_counts = pred_counts + jax.random.normal(k4, (B, T), dtype=jnp.float32)
    return pred_maps, pred_counts, gt_maps, gt_counts


if __name__ == "__main__":
    lamda, beta = 0.1, 0.5   # beta unused in forward (kept for parity)
    key = jax.random.PRNGKey(0)
    k1, k2, k3 = jax.random.split(key, 3)

    # ---- test 1: f32 maps, single full-extent block, MXU lane-reduce path ----
    B, T, H, W = 2, 8, 16, 16
    pm, pc, gm, gc = _make_inputs(k1, B, T, H, W)
    out = jax.block_until_ready(tan_loss_pallas(pm, pc, gm, gc, lamda, beta))
    ref = tan_loss_ref(pm, pc, gm, gc, lamda)
    np.testing.assert_allclose(np.asarray(out), np.asarray(ref), rtol=1e-5, atol=1e-5)

    # ---- test 2: bf16 maps in HBM (half the DMA bytes), f32 math in-kernel ----
    pm_bf, gm_bf = pm.astype(jnp.bfloat16), gm.astype(jnp.bfloat16)
    out_bf = jax.block_until_ready(tan_loss_pallas(pm_bf, pc, gm_bf, gc, lamda, beta))
    ref_bf = tan_loss_ref(pm_bf.astype(jnp.float32), pc,
                          gm_bf.astype(jnp.float32), gc, lamda)
    np.testing.assert_allclose(np.asarray(out_bf), np.asarray(ref_bf),
                               rtol=1e-5, atol=1e-5)

    # ---- test 3: multi row-block grid with a masked partial boundary block ----
    B3, T3 = 3, 7                                        # B*T = 21, rows=8 -> 3 blocks
    pm3, pc3, gm3, gc3 = _make_inputs(k2, B3, T3, H, W)
    out3 = jax.block_until_ready(
        tan_loss_pallas(pm3, pc3, gm3, gc3, lamda, beta, rows_per_block=8))
    ref3 = tan_loss_ref(pm3, pc3, gm3, gc3, lamda)
    np.testing.assert_allclose(np.asarray(out3), np.asarray(ref3), rtol=1e-5, atol=1e-5)

    # ---- test 4: forced column tiling (scratch accumulation across the lane
    # axis) combined with row blocking + boundary row mask ----
    out4 = jax.block_until_ready(
        tan_loss_pallas(pm3, pc3, gm3, gc3, lamda, beta,
                        rows_per_block=8, cols_per_block=128))
    np.testing.assert_allclose(np.asarray(out4), np.asarray(ref3), rtol=1e-5, atol=1e-5)

    # ---- test 5: larger H*W -> jnp.sum lane-reduce path (no MXU ones-matmul) ----
    B5, T5, H5, W5 = 2, 4, 64, 64
    pm5, pc5, gm5, gc5 = _make_inputs(k3, B5, T5, H5, W5)
    out5 = jax.block_until_ready(tan_loss_pallas(pm5, pc5, gm5, gc5, lamda, beta))
    ref5 = tan_loss_ref(pm5, pc5, gm5, gc5, lamda)
    np.testing.assert_allclose(np.asarray(out5), np.asarray(ref5), rtol=1e-5, atol=1e-5)

    print("KERNEL_OK")
</pallas_src>

<mosaic_0001>
module attributes {stable_mosaic.version = 11 : i64} {
  func.func @_tan_map_kernel(%arg0: i32, %arg1: i32, %arg2: memref<16x256xf32, #tpu.memory_space<vmem>>, %arg3: memref<16x256xf32, #tpu.memory_space<vmem>>, %arg4: memref<1x8x128xf32, #tpu.memory_space<vmem>>) attributes {dimension_semantics = [#tpu.dimension_semantics<parallel>, #tpu.dimension_semantics<arbitrary>], iteration_bounds = array<i64: 1, 1>, scalar_prefetch = 0 : i64, scratch_operands = 0 : i64, tpu.core_type = #tpu.core_type<tc>, window_params = [{transform_indices = @transform_0, window_bounds = array<i64: 16, 256>}, {transform_indices = @transform_1, window_bounds = array<i64: 16, 256>}, {transform_indices = @transform_2, window_bounds = array<i64: 1, 8, 128>}]} {
    %c0 = arith.constant 0 : index
    %c0_0 = arith.constant 0 : index
    %0 = vector.load %arg2[%c0, %c0_0] : memref<16x256xf32, #tpu.memory_space<vmem>>, vector<16x256xf32>
    %c0_1 = arith.constant 0 : index
    %c0_2 = arith.constant 0 : index
    %1 = vector.load %arg3[%c0_1, %c0_2] : memref<16x256xf32, #tpu.memory_space<vmem>>, vector<16x256xf32>
    %2 = arith.subf %0, %1 : vector<16x256xf32>
    %3 = math.absf %2 : vector<16x256xf32>
    %4 = arith.mulf %2, %2 : vector<16x256xf32>
    %cst = arith.constant 1.000000e+00 : f32
    %5 = vector.broadcast %cst : f32 to vector<256x128xf32>
    %cst_3 = arith.constant dense<0.000000e+00> : vector<16x128xf32>
    %6 = tpu.matmul %3, %5, %cst_3 {dimension_numbers = #tpu.dot_dimension_numbers<[1], [0], [0], [1], [0, 0, 1, 1], [], []>} : vector<16x256xf32>, vector<256x128xf32>, vector<16x128xf32> -> vector<16x128xf32>
    %cst_4 = arith.constant dense<0.000000e+00> : vector<16x128xf32>
    %7 = tpu.matmul %4, %5, %cst_4 {dimension_numbers = #tpu.dot_dimension_numbers<[1], [0], [0], [1], [0, 0, 1, 1], [], []>} : vector<16x256xf32>, vector<256x128xf32>, vector<16x128xf32> -> vector<16x128xf32>
    %cst_5 = arith.constant 3.906250e-03 : f32
    %8 = vector.broadcast %cst_5 : f32 to vector<16x128xf32>
    %9 = arith.mulf %6, %8 : vector<16x128xf32>
    %cst_6 = arith.constant 3.906250e-03 : f32
    %10 = vector.broadcast %cst_6 : f32 to vector<16x128xf32>
    %11 = arith.mulf %7, %10 : vector<16x128xf32>
    %cst_7 = arith.constant 1.000000e+00 : f32
    %12 = vector.broadcast %cst_7 : f32 to vector<16x128xf32>
    %13 = arith.cmpf olt, %9, %12 : vector<16x128xf32>
    %cst_8 = arith.constant 5.000000e-01 : f32
    %14 = vector.broadcast %cst_8 : f32 to vector<16x128xf32>
    %15 = arith.mulf %14, %11 : vector<16x128xf32>
    %cst_9 = arith.constant 5.000000e-01 : f32
    %16 = vector.broadcast %cst_9 : f32 to vector<16x128xf32>
    %17 = arith.subf %9, %16 : vector<16x128xf32>
    %18 = arith.select %13, %15, %17 : vector<16x128xi1>, vector<16x128xf32>
    %19 = vector.extract_strided_slice %18 {offsets = [0, 0], sizes = [16, 1], strides = [1, 1]} : vector<16x128xf32> to vector<16x1xf32>
    %20 = vector.shape_cast %19 : vector<16x1xf32> to vector<1x16x1xf32>
    %cst_10 = arith.constant dense<0.000000e+00> : vector<1xf32>
    %21 = vector.multi_reduction <add>, %20, %cst_10 [1, 2] : vector<1x16x1xf32> to vector<1xf32>
    %22 = vector.shape_cast %21 : vector<1xf32> to vector<1x1x1xf32>
    %23 = vector.extract %22[0, 0, 0] : f32 from vector<1x1x1xf32>
    %24 = vector.broadcast %23 : f32 to vector<1x8x128xf32>
    %c0_11 = arith.constant 0 : index
    %c0_12 = arith.constant 0 : index
    %c0_13 = arith.constant 0 : index
    %25 = vector.load %arg4[%c0_11, %c0_12, %c0_13] : memref<1x8x128xf32, #tpu.memory_space<vmem>>, vector<1x8x128xf32>
    tpu.vector_store %arg4[%c0_11, %c0_12, %c0_13], %24 {strides = array<i32>} : memref<1x8x128xf32, #tpu.memory_space<vmem>>, vector<1x8x128xf32>,
    return
  }
  func.func @transform_0(%arg0: i32, %arg1: i32) -> (i32, i32) {
    %c0_i32 = arith.constant 0 : i32
    return %arg0, %arg1 : i32, i32
  }
  func.func @transform_1(%arg0: i32, %arg1: i32) -> (i32, i32) {
    %c0_i32 = arith.constant 0 : i32
    return %arg0, %arg1 : i32, i32
  }
  func.func @transform_2(%arg0: i32, %arg1: i32) -> (i32, i32, i32) {
    %c0_i32 = arith.constant 0 : i32
    %c0_i32_0 = arith.constant 0 : i32
    %c0_i32_1 = arith.constant 0 : i32
    return %arg0, %c0_i32, %c0_i32_0 : i32, i32, i32
  }
}

</mosaic_0001>

<llo_original>
// kernel: tpu_custom_call.1
$region0: #{tpu_custom_call.1}
  #allocation0 [shape = 'u32[]', space=smem, size = 0x4, offset = 0x4, fixed_abs, tag = 'smem constant byte address 0x4 - core index']
  #allocation1 [shape = 'u32[144,128]{1,0:T(1,128)}', space=vmem, size = 0x12000, scoped, tag = 'internal scratch']
  %s0 = inlined_call_operand.hbm [shape: f32[16,256], index: 0, kind: input, shape index: {}]
  %s1 = inlined_call_operand.hbm [shape: f32[16,256], index: 1, kind: input, shape index: {}]
  %s2 = inlined_call_operand.hbm [shape: f32[1,8,128], index: 2, kind: output, shape index: {}]
  %s3 = sld [smem:[#allocation0]]
  $region26: #{tpu_custom_call.1} parent=0
    _
  %s5 = ssub.s32 1, %s3
  %s6 = scalar_select 0, %s5, %s3
  $region1: #{tpu_custom_call.1} parent=0
    #allocation2 [shape = 'u8[16384]{0}', space=vmem, size = 0x4000, scoped, tag = 'input window, operand 0, single buffered']
    #allocation3 [shape = 's32[1]{0}', space=sflag, size = 0x4, scoped, tag = 'scoped memory for tpu_custom_call.1']
    #allocation4 [shape = 's32[1]{0}', space=sflag, size = 0x4, scoped, tag = 'scoped memory for tpu_custom_call.1']
    #allocation5 [shape = 'u8[16384]{0}', space=vmem, size = 0x4000, scoped, tag = 'input window, operand 1, single buffered']
    #allocation6 [shape = 's32[1]{0}', space=sflag, size = 0x4, scoped, tag = 'scoped memory for tpu_custom_call.1']
    #allocation7 [shape = 'u8[4096]{0}', space=vmem, size = 0x1000, scoped, tag = 'output window, operand 0, single buffered']
    %7 = vsyncpa [#allocation3], 0
    %8 = vsyncpa [#allocation6], 0
    %9 = vsyncpa [#allocation4], 0
    // Predicated region
    $region2: #{tpu_custom_call.1} parent=1 // pred_check
      _
    $region3: #{tpu_custom_call.1} parent=1 // pred_check_branch
      %11 = sbr.rel (0) target = $region5
    $region4: #{tpu_custom_call.1} parent=1 // pred_region
      %s13 = ssub.s32 512, 512
      %14 = vsyncadd [#allocation3], %s13
      %s15 = sshll.u32 [#allocation2], 4
      %s16 = int_to_ptr.vmem [resolvable:$true] %s15
      %21 = dma.hbm_to_vmem [thread:$0]  %s0, 512, %s16, [#allocation3], 256, 256, 16
    $region5: #{tpu_custom_call.1} parent=1 // pred_fallthru
      _
    // Predicated region
    $region6: #{tpu_custom_call.1} parent=1 // pred_check
      _
    $region7: #{tpu_custom_call.1} parent=1 // pred_check_branch
      %23 = sbr.rel (0) target = $region9
    $region8: #{tpu_custom_call.1} parent=1 // pred_region
      %s25 = ssub.s32 512, 512
      %26 = vsyncadd [#allocation6], %s25
      %s27 = sshll.u32 [#allocation5], 4
      %s28 = int_to_ptr.vmem [resolvable:$true] %s27
      %33 = dma.hbm_to_vmem [thread:$0]  %s1, 512, %s28, [#allocation6], 256, 256, 16
    $region9: #{tpu_custom_call.1} parent=1 // pred_fallthru
      _
    // Predicated region
    $region10: #{tpu_custom_call.1} parent=1 // pred_check
      _
    $region11: #{tpu_custom_call.1} parent=1 // pred_check_branch
      %35 = sbr.rel (0) target = $region13
    $region12: #{tpu_custom_call.1} parent=1 // pred_region
      %36 = dma.done [#allocation3], 512
    $region13: #{tpu_custom_call.1} parent=1 // pred_fallthru
      _
    // Predicated region
    $region14: #{tpu_custom_call.1} parent=1 // pred_check
      _
    $region15: #{tpu_custom_call.1} parent=1 // pred_check_branch
      %38 = sbr.rel (0) target = $region17
    $region16: #{tpu_custom_call.1} parent=1 // pred_region
      %39 = dma.done [#allocation6], 512
    $region17: #{tpu_custom_call.1} parent=1 // pred_fallthru
      _
    %v40 = vld [vmem:[#allocation2] sm:$0xff]
    %v41 = vld [vmem:[#allocation2 + $0x8] sm:$0xff]
    %v42 = vld [vmem:[#allocation2 + $0x10] sm:$0xff]
    %v43 = vld [vmem:[#allocation2 + $0x18] sm:$0xff]
    %v44 = vld [vmem:[#allocation5] sm:$0xff]
    %v45 = vld [vmem:[#allocation5 + $0x8] sm:$0xff]
    %v46 = vld [vmem:[#allocation5 + $0x10] sm:$0xff]
    %v47 = vld [vmem:[#allocation5 + $0x18] sm:$0xff]
    %v48 = vsub.f32 %v40, %v44
    %v49 = vsub.f32 %v41, %v45
    %v50 = vsub.f32 %v42, %v46
    %v51 = vsub.f32 %v43, %v47
    %v52 = vand.u32 2147483647, %v48
    %v53 = vand.u32 2147483647, %v49
    %v54 = vand.u32 2147483647, %v50
    %v55 = vand.u32 2147483647, %v51
    %v56 = vmul.f32 %v48, %v48
    %v57 = vmul.f32 %v49, %v49
    %v58 = vmul.f32 %v50, %v50
    %v59 = vmul.f32 %v51, %v51
    %60 = vmatprep.subr.mxu0 0.0
    %61 = vmatpush1.msra.mxu0 1.0
    %62 = vmatprep.subr.mxu0 0.0
    %63 = vmatpush1.msra.mxu0 1.0
    %64 = vmatprep.subr.mxu0 0.0
    %65 = vmatpush1.msra.mxu0 1.0
    %66 = vmatprep.subr.mxu0 0.0
    %67 = vmatpush1.msra.mxu0 1.0
    %68 = vmatprep.subr.mxu0 0.0
    %69 = vmatpush1.msra.mxu0 1.0
    %70 = vmatprep.subr.mxu0 0.0
    %71 = vmatpush1.msra.mxu0 1.0
    %72 = vmatprep.subr.mxu0 0.0
    %73 = vmatpush1.msra.mxu0 1.0
    %74 = vmatprep.subr.mxu0 0.0
    %75 = vmatpush1.msra.mxu0 1.0
    %76 = vmatprep.subr.mxu0 0.0
    %77 = vmatpush1.msra.mxu0 1.0
    %78 = vmatprep.subr.mxu0 0.0
    %79 = vmatpush1.msra.mxu0 1.0
    %80 = vmatprep.subr.mxu0 0.0
    %81 = vmatpush1.msra.mxu0 1.0
    %82 = vmatprep.subr.mxu0 0.0
    %83 = vmatpush1.msra.mxu0 1.0
    %84 = vmatprep.subr.mxu0 0.0
    %85 = vmatpush1.msra.mxu0 1.0
    %86 = vmatprep.subr.mxu0 0.0
    %87 = vmatpush1.msra.mxu0 1.0
    %88 = vmatprep.subr.mxu0 0.0
    %89 = vmatpush1.msra.mxu0 1.0
    %90 = vmatprep.subr.mxu0 0.0
    %91 = vmatpush1.msra.mxu0 1.0
    %92 = vmatprep.subr.mxu0 0.0
    %93 = vmatpush1.msra.mxu0 1.0
    %94 = vmatprep.subr.mxu0 0.0
    %95 = vmatpush1.msra.mxu0 1.0
    %96 = vmatprep.subr.mxu0 0.0
    %97 = vmatpush1.msra.mxu0 1.0
    %98 = vmatprep.subr.mxu0 0.0
    %99 = vmatpush1.msra.mxu0 1.0
    %100 = vmatprep.subr.mxu0 0.0
    %101 = vmatpush1.msra.mxu0 1.0
    %102 = vmatprep.subr.mxu0 0.0
    %103 = vmatpush1.msra.mxu0 1.0
    %104 = vmatprep.subr.mxu0 0.0
    %105 = vmatpush1.msra.mxu0 1.0
    %106 = vmatprep.subr.mxu0 0.0
    %107 = vmatpush1.msra.mxu0 1.0
    %108 = vmatprep.subr.mxu0 0.0
    %109 = vmatpush1.msra.mxu0 1.0
    %110 = vmatprep.subr.mxu0 0.0
    %111 = vmatpush1.msra.mxu0 1.0
    %112 = vmatprep.subr.mxu0 0.0
    %113 = vmatpush1.msra.mxu0 1.0
    %114 = vmatprep.subr.mxu0 0.0
    %115 = vmatpush1.msra.mxu0 1.0
    %116 = vmatprep.subr.mxu0 0.0
    %117 = vmatpush1.msra.mxu0 1.0
    %118 = vmatprep.subr.mxu0 0.0
    %119 = vmatpush1.msra.mxu0 1.0
    %120 = vmatprep.subr.mxu0 0.0
    %121 = vmatpush1.msra.mxu0 1.0
    %122 = vmatprep.subr.mxu0 0.0
    %123 = vmatpush1.msra.mxu0 1.0
    %124 = vmatprep.mubr.f32.mxu0 %v53
    %125 = vmatmul.mubr.f32.gmra.mrb[0].mxu0 %v52
    %v126 = vpop.f32.mrb[0].mxu0
    %v127 = vadd.f32 0.0, %v126
    %v128 = vpop.f32.mrb[0].mxu0
    %129 = vmatprep.mubr.f32.mxu0 %v55
    %130 = vmatmul.mubr.f32.gmra.mrb[0].mxu0 %v54
    %v131 = vpop.f32.mrb[0].mxu0
    %v132 = vadd.f32 0.0, %v131
    %v133 = vpop.f32.mrb[0].mxu0
    %134 = vdwg.mxu0
    %135 = vmatprep.subr.mxu0 0.0
    %136 = vmatpush1.msra.mxu0 1.0
    %137 = vmatprep.subr.mxu0 0.0
    %138 = vmatpush1.msra.mxu0 1.0
    %139 = vmatprep.subr.mxu0 0.0
    %140 = vmatpush1.msra.mxu0 1.0
    %141 = vmatprep.subr.mxu0 0.0
    %142 = vmatpush1.msra.mxu0 1.0
    %143 = vmatprep.subr.mxu0 0.0
    %144 = vmatpush1.msra.mxu0 1.0
    %145 = vmatprep.subr.mxu0 0.0
    %146 = vmatpush1.msra.mxu0 1.0
    %147 = vmatprep.subr.mxu0 0.0
    %148 = vmatpush1.msra.mxu0 1.0
    %149 = vmatprep.subr.mxu0 0.0
    %150 = vmatpush1.msra.mxu0 1.0
    %151 = vmatprep.subr.mxu0 0.0
    %152 = vmatpush1.msra.mxu0 1.0
    %153 = vmatprep.subr.mxu0 0.0
    %154 = vmatpush1.msra.mxu0 1.0
    %155 = vmatprep.subr.mxu0 0.0
    %156 = vmatpush1.msra.mxu0 1.0
    %157 = vmatprep.subr.mxu0 0.0
    %158 = vmatpush1.msra.mxu0 1.0
    %159 = vmatprep.subr.mxu0 0.0
    %160 = vmatpush1.msra.mxu0 1.0
    %161 = vmatprep.subr.mxu0 0.0
    %162 = vmatpush1.msra.mxu0 1.0
    %163 = vmatprep.subr.mxu0 0.0
    %164 = vmatpush1.msra.mxu0 1.0
    %165 = vmatprep.subr.mxu0 0.0
    %166 = vmatpush1.msra.mxu0 1.0
    %167 = vmatprep.subr.mxu0 0.0
    %168 = vmatpush1.msra.mxu0 1.0
    %169 = vmatprep.subr.mxu0 0.0
    %170 = vmatpush1.msra.mxu0 1.0
    %171 = vmatprep.subr.mxu0 0.0
    %172 = vmatpush1.msra.mxu0 1.0
    %173 = vmatprep.subr.mxu0 0.0
    %174 = vmatpush1.msra.mxu0 1.0
    %175 = vmatprep.subr.mxu0 0.0
    %176 = vmatpush1.msra.mxu0 1.0
    %177 = vmatprep.subr.mxu0 0.0
    %178 = vmatpush1.msra.mxu0 1.0
    %179 = vmatprep.subr.mxu0 0.0
    %180 = vmatpush1.msra.mxu0 1.0
    %181 = vmatprep.subr.mxu0 0.0
    %182 = vmatpush1.msra.mxu0 1.0
    %183 = vmatprep.subr.mxu0 0.0
    %184 = vmatpush1.msra.mxu0 1.0
    %185 = vmatprep.subr.mxu0 0.0
    %186 = vmatpush1.msra.mxu0 1.0
    %187 = vmatprep.subr.mxu0 0.0
    %188 = vmatpush1.msra.mxu0 1.0
    %189 = vmatprep.subr.mxu0 0.0
    %190 = vmatpush1.msra.mxu0 1.0
    %191 = vmatprep.subr.mxu0 0.0
    %192 = vmatpush1.msra.mxu0 1.0
    %193 = vmatprep.subr.mxu0 0.0
    %194 = vmatpush1.msra.mxu0 1.0
    %195 = vmatprep.subr.mxu0 0.0
    %196 = vmatpush1.msra.mxu0 1.0
    %197 = vmatprep.subr.mxu0 0.0
    %198 = vmatpush1.msra.mxu0 1.0
    %199 = vmatprep.mubr.f32.mxu0 %v57
    %200 = vmatmul.mubr.f32.gmra.mrb[0].mxu0 %v56
    %v201 = vpop.f32.mrb[0].mxu0
    %v202 = vadd.f32 0.0, %v201
    %v203 = vpop.f32.mrb[0].mxu0
    %204 = vmatprep.mubr.f32.mxu0 %v59
    %205 = vmatmul.mubr.f32.gmra.mrb[0].mxu0 %v58
    %v206 = vpop.f32.mrb[0].mxu0
    %v207 = vadd.f32 0.0, %v206
    %v208 = vpop.f32.mrb[0].mxu0
    %209 = vdwg.mxu0
    %v210 = vmul.f32 %v127, 0.00390625
    %v211 = vmul.f32 %v132, 0.00390625
    %v212 = vmul.f32 %v202, 0.00390625
    %v213 = vmul.f32 %v207, 0.00390625
    %vm214 = vcmp.lt.f32.partialorder %v210, 1.0
    %vm215 = vcmp.lt.f32.partialorder %v211, 1.0
    %v216 = vmul.f32 %v212, 0.5
    %v217 = vmul.f32 %v213, 0.5
    %v218 = vsub.f32 %v210, 0.5
    %v219 = vsub.f32 %v211, 0.5
    %v220 = vsel %vm214, %v216, %v218
    %v221 = vsel %vm215, %v217, %v219
    %vm222 = vcmask 7168
    %v223 = vsel %vm222, %v220, 0.0
    %v224 = vsel %vm222, %v221, 0.0
    %v225 = vadd.f32 %v223, %v224
    %226 = vadd.xlane.f32.xlu0 %v225
    %v227 = vpop.xlane.xlu0 %226
    %v228 = vrot.slane %v227, 4
    %v229 = vadd.f32 %v227, %v228
    %v230 = vrot.slane %v229, 2
    %v231 = vadd.f32 %v229, %v230
    %v232 = vrot.slane %v231, 1
    %v233 = vadd.f32 %v231, %v232
    %s234 = vtos %v233
    %v235 = vstv %s234
    %236 = vst [vmem:[#allocation7] sm:$0xff] %v235
    // Predicated region
    $region18: #{tpu_custom_call.1} parent=1 // pred_check
      _
    $region19: #{tpu_custom_call.1} parent=1 // pred_check_branch
      %238 = sbr.rel (0) target = $region21
    $region20: #{tpu_custom_call.1} parent=1 // pred_region
      %s240 = ssub.s32 128, 128
      %241 = vsyncadd [#allocation4], %s240
      %s243 = sshll.u32 [#allocation7], 4
      %s244 = int_to_ptr.vmem [resolvable:$true] %s243
      %246 = dma.vmem_to_hbm [thread:$0]  %s244, 128, %s2, [#allocation4]
    $region21: #{tpu_custom_call.1} parent=1 // pred_fallthru
      _
    // Predicated region
    $region22: #{tpu_custom_call.1} parent=1 // pred_check
      _
    $region23: #{tpu_custom_call.1} parent=1 // pred_check_branch
      %248 = sbr.rel (0) target = $region25
    $region24: #{tpu_custom_call.1} parent=1 // pred_region
      %249 = dma.done [#allocation4], 128
    $region25: #{tpu_custom_call.1} parent=1 // pred_fallthru
      _
    %250 = vsyncpa [#allocation3], 1
    %251 = vsyncpa [#allocation6], 1
    %252 = vsyncpa [#allocation4], 1

</llo_original>
